<compile_context>
chip_gen: v6e
topology: v6e:2x2x1
jax: 0.10.0
libtpu: 0.0.40
codegen_flags: <defaults>
</compile_context>

<pallas_src>
import functools
import numpy as np
import jax
import jax.numpy as jnp
from jax import lax
from jax.experimental import pallas as pl
from jax.experimental.pallas import tpu as pltpu

IN_C = 4
OUT_C = 8
BATCH = 2
H = W = 16
LEAKY_SLOPE = 0.01  # torch.nn.LeakyReLU default negative_slope


# ----------------------------- Pallas kernel --------------------------------
def _res_block_down_kernel(p_ref, ax_ref, wd_ref, bd_ref, w1_ref, b1_ref,
                           gm_ref, gb_ref, eca_ref, wid_ref, bid_ref,
                           msk_ref, pool_ref, bsel_ref, o_ref, scr_ref,
                           *, cout, w2, n_lanes):
    f32 = jnp.float32

    # conv_donw: 3x3 / stride 2 / pad 1 -> one (Cout, 9*Cin) @ (9*Cin, B*P) matmul + bias
    y1 = jnp.dot(wd_ref[...], p_ref[...], preferred_element_type=f32) + bd_ref[...]
    # LeakyReLU
    y1 = jnp.where(y1 > 0, y1, LEAKY_SLOPE * y1)

    # conv_1: 3x3 / stride 1 / pad 1 on the in-kernel activation.
    # Each tap = XLU lane roll + 0/1 edge mask (zero padding; masks also prevent any
    # cross-batch leakage since invalid lanes are zeroed).  Taps are stacked into a
    # (9*Cout, B*P) scratch and consumed by a single matmul.
    t = 0
    for dy in (-1, 0, 1):
        for dx in (-1, 0, 1):
            s = dy * w2 + dx
            shifted = y1 if s == 0 else pltpu.roll(y1, shift=(-s) % n_lanes, axis=1)
            scr_ref[t * cout:(t + 1) * cout, :] = shifted * msk_ref[t:t + 1, :]
            t += 1
    y2 = jnp.dot(w1_ref[...], scr_ref[...], preferred_element_type=f32) + b1_ref[...]

    # GDN: y / sqrt(beta + gamma @ y^2)   (channel-mixing matmul, channel-major)
    norm = jnp.dot(gm_ref[...], y2 * y2, preferred_element_type=f32) + gb_ref[...]
    y3 = y2 * jax.lax.rsqrt(norm)

    # ECA: per-batch global average pool (segmented mean via matmul), conv1d(k=3) over
    # channels as a banded (C,C) matmul, sigmoid gate broadcast back per batch segment.
    pooled = jnp.dot(y3, pool_ref[...], preferred_element_type=f32)                 # (Cout, B)
    gate = jax.nn.sigmoid(jnp.dot(eca_ref[...], pooled, preferred_element_type=f32))  # (Cout, B)
    gate_full = jnp.dot(gate, bsel_ref[...], preferred_element_type=f32)            # (Cout, B*P)
    y4 = y3 * gate_full

    # identity path: AvgPool2d(2,2) (wrapper) -> 1x1 conv, residual add
    ident = jnp.dot(wid_ref[...], ax_ref[...], preferred_element_type=f32) + bid_ref[...]
    o_ref[...] = (y4 + ident).astype(o_ref.dtype)


# ----------------------------- static constants ------------------------------
def _tap_masks_np(h2, w2, batch):
    """(9, B*P) 0/1 validity masks for the conv_1 taps (zero padding at image edges)."""
    p = h2 * w2
    masks = np.zeros((9, batch * p), np.float32)
    t = 0
    for dy in (-1, 0, 1):
        for dx in (-1, 0, 1):
            for b in range(batch):
                for i in range(h2):
                    for j in range(w2):
                        if 0 <= i + dy < h2 and 0 <= j + dx < w2:
                            masks[t, b * p + i * w2 + j] = 1.0
            t += 1
    return masks


def _batch_segment_mats_np(p, batch):
    """pool (B*P, B): per-batch mean weights; bsel (B, B*P): per-batch broadcast selector."""
    n = batch * p
    pool = np.zeros((n, batch), np.float32)
    bsel = np.zeros((batch, n), np.float32)
    for b in range(batch):
        pool[b * p:(b + 1) * p, b] = 1.0 / p
        bsel[b, b * p:(b + 1) * p] = 1.0
    return pool, bsel


# ----------------------------- forward wrapper -------------------------------
def res_block_down_forward(x, params):
    """x: (B, in_c, H, W) float32 -> (B, out_c, H/2, W/2) float32."""
    B, Cin, Hh, Ww = x.shape
    Cout = params['wd_t'].shape[0]
    H2, W2 = Hh // 2, Ww // 2
    P = H2 * W2
    N = B * P  # 128 lanes: batch fused into the pixel/lane dimension

    # Layout plumbing (tiny, trace-time constant structure): NCHW -> channel-major
    # im2col for the stride-2 conv and the 2x2 avg pool, emitted directly as
    # (rows = channels, lanes = B*P) operands matching the kernel layout.
    # TODO(synk): the stride-2 lane subsampling is not expressible as a roll, so the
    # im2col stays in this cheap XLA prologue (input is only 8 KiB).
    x_nhwc = jnp.transpose(x, (0, 2, 3, 1))
    xp = jnp.pad(x_nhwc, ((0, 0), (1, 1), (1, 1), (0, 0)))
    taps = []
    for ky in range(3):
        for kx in range(3):
            taps.append(xp[:, ky:ky + 2 * H2 - 1:2, kx:kx + 2 * W2 - 1:2, :])
    patches = jnp.stack(taps, axis=0)                                  # (9, B, H2, W2, Cin)
    patches = jnp.transpose(patches, (0, 4, 1, 2, 3)).reshape(9 * Cin, N)

    avg = x_nhwc.reshape(B, H2, 2, W2, 2, Cin).mean(axis=(2, 4))       # (B, H2, W2, Cin)
    avg_cm = jnp.transpose(avg, (3, 0, 1, 2)).reshape(Cin, N)

    masks = jnp.asarray(_tap_masks_np(H2, W2, B))
    pool_np, bsel_np = _batch_segment_mats_np(P, B)
    pool_mat = jnp.asarray(pool_np)
    bsel_mat = jnp.asarray(bsel_np)

    operands = [patches, avg_cm,
                params['wd_t'], params['bd_c'],
                params['w1_t'], params['b1_c'],
                params['gamma'], params['beta_c'],
                params['eca_mat'],
                params['wid_t'], params['bid_c'],
                masks, pool_mat, bsel_mat]

    kern = functools.partial(_res_block_down_kernel, cout=Cout, w2=W2, n_lanes=N)
    out_cm = pl.pallas_call(
        kern,
        out_shape=jax.ShapeDtypeStruct((Cout, N), jnp.float32),
        grid=(1,),
        in_specs=[pl.BlockSpec(op.shape, lambda i: (0, 0)) for op in operands],
        out_specs=pl.BlockSpec((Cout, N), lambda i: (0, 0)),
        scratch_shapes=[pltpu.VMEM((9 * Cout, N), jnp.float32)],
        compiler_params=pltpu.CompilerParams(dimension_semantics=("arbitrary",)),
    )(*operands)

    # channel-major (Cout, B*P) -> NCHW
    return jnp.transpose(out_cm.reshape(Cout, B, H2, W2), (1, 0, 2, 3))


# ----------------------------- params ---------------------------------------
def init_params(key, in_c, out_c):
    ks = jax.random.split(key, 8)

    def nrm(k, shape, scale):
        return (scale * jax.random.normal(k, shape)).astype(jnp.float32)

    # canonical (reference) parameters
    w_down = nrm(ks[0], (3, 3, in_c, out_c), 1.0 / np.sqrt(9 * in_c))   # HWIO
    b_down = nrm(ks[1], (out_c,), 0.02)
    w1 = nrm(ks[2], (3, 3, out_c, out_c), 1.0 / np.sqrt(9 * out_c))     # HWIO
    b1 = nrm(ks[3], (out_c,), 0.02)
    w_id = nrm(ks[4], (in_c, out_c), 1.0 / np.sqrt(in_c))
    b_id = nrm(ks[5], (out_c,), 0.02)
    eca_w = nrm(ks[6], (3,), 1.0 / np.sqrt(3.0))
    # GDN effective non-negative params (compressai init 0.1*I, plus a small non-neg
    # perturbation so the channel-mixing matmul is actually exercised)
    gamma = (0.1 * jnp.eye(out_c) + 0.01 * jnp.abs(nrm(ks[7], (out_c, out_c), 1.0))).astype(jnp.float32)
    beta = jnp.ones((out_c,), jnp.float32)

    params = dict(w_down=w_down, b_down=b_down, w1=w1, b1=b1, w_id=w_id, b_id=b_id,
                  eca_w=eca_w, gamma=gamma, beta=beta)

    # derived, channel-major kernel operands (pre-transposed outside the jitted hot path)
    params['wd_t'] = jnp.transpose(w_down.reshape(9, in_c, out_c), (2, 0, 1)).reshape(out_c, 9 * in_c)
    params['w1_t'] = jnp.transpose(w1.reshape(9, out_c, out_c), (2, 0, 1)).reshape(out_c, 9 * out_c)
    params['wid_t'] = w_id.T
    params['bd_c'] = b_down.reshape(out_c, 1)
    params['b1_c'] = b1.reshape(out_c, 1)
    params['bid_c'] = b_id.reshape(out_c, 1)
    params['beta_c'] = beta.reshape(out_c, 1)
    # z[c] = w0*pooled[c-1] + w1*pooled[c] + w2*pooled[c+1]  (applied as E @ pooled_col)
    params['eca_mat'] = (eca_w[0] * jnp.eye(out_c, k=-1) + eca_w[1] * jnp.eye(out_c)
                         + eca_w[2] * jnp.eye(out_c, k=1)).astype(jnp.float32)
    return params


# ----------------------------- pure-JAX reference ----------------------------
def reference_forward(x, params):
    B, Cin, Hh, Ww = x.shape
    Cout = params['b_down'].shape[0]
    H2, W2 = Hh // 2, Ww // 2
    x_nhwc = jnp.transpose(x, (0, 2, 3, 1))
    dn = ('NHWC', 'HWIO', 'NHWC')
    y = lax.conv_general_dilated(x_nhwc, params['w_down'], (2, 2), ((1, 1), (1, 1)),
                                 dimension_numbers=dn) + params['b_down']
    y = jnp.where(y > 0, y, LEAKY_SLOPE * y)
    y = lax.conv_general_dilated(y, params['w1'], (1, 1), ((1, 1), (1, 1)),
                                 dimension_numbers=dn) + params['b1']
    norm = jnp.einsum('bhwj,ij->bhwi', y * y, params['gamma']) + params['beta']
    y = y * jax.lax.rsqrt(norm)
    pooled = jnp.mean(y, axis=(1, 2))                      # (B, Cout)
    w3 = params['eca_w']
    padded = jnp.pad(pooled, ((0, 0), (1, 1)))
    z = w3[0] * padded[:, :-2] + w3[1] * padded[:, 1:-1] + w3[2] * padded[:, 2:]
    y = y * jax.nn.sigmoid(z)[:, None, None, :]
    avg = x_nhwc.reshape(B, H2, 2, W2, 2, Cin).mean(axis=(2, 4))
    ident = jnp.einsum('bhwc,cd->bhwd', avg, params['w_id']) + params['b_id']
    return jnp.transpose(y + ident, (0, 3, 1, 2))


# ------------------------------------ main ------------------------------------
if __name__ == "__main__":
    key = jax.random.PRNGKey(0)
    kp, kx = jax.random.split(key)
    params = init_params(kp, IN_C, OUT_C)
    x = jax.random.normal(kx, (BATCH, IN_C, H, W), jnp.float32)

    fwd = jax.jit(res_block_down_forward)
    out = jax.block_until_ready(fwd(x, params))

    assert out.shape == (BATCH, OUT_C, H // 2, W // 2)
    assert out.dtype == jnp.float32
    assert bool(jnp.all(jnp.isfinite(out)))

    ref = reference_forward(x, params)
    max_err = float(jnp.max(jnp.abs(out - ref)))
    assert bool(jnp.allclose(out, ref, rtol=1e-3, atol=1e-3)), max_err

    print("KERNEL_OK")
</pallas_src>

<mosaic_0001>
module attributes {stable_mosaic.version = 11 : i64} {
  func.func @_res_block_down_kernel(%arg0: i32, %arg1: memref<36x128xf32, #tpu.memory_space<vmem>>, %arg2: memref<4x128xf32, #tpu.memory_space<vmem>>, %arg3: memref<8x36xf32, #tpu.memory_space<vmem>>, %arg4: memref<8x1xf32, #tpu.memory_space<vmem>>, %arg5: memref<8x72xf32, #tpu.memory_space<vmem>>, %arg6: memref<8x1xf32, #tpu.memory_space<vmem>>, %arg7: memref<8x8xf32, #tpu.memory_space<vmem>>, %arg8: memref<8x1xf32, #tpu.memory_space<vmem>>, %arg9: memref<8x8xf32, #tpu.memory_space<vmem>>, %arg10: memref<8x4xf32, #tpu.memory_space<vmem>>, %arg11: memref<8x1xf32, #tpu.memory_space<vmem>>, %arg12: memref<9x128xf32, #tpu.memory_space<vmem>>, %arg13: memref<128x2xf32, #tpu.memory_space<vmem>>, %arg14: memref<2x128xf32, #tpu.memory_space<vmem>>, %arg15: memref<8x128xf32, #tpu.memory_space<vmem>>, %arg16: memref<72x128xf32, #tpu.memory_space<vmem>>) attributes {dimension_semantics = [#tpu.dimension_semantics<arbitrary>], iteration_bounds = array<i64: 1>, scalar_prefetch = 0 : i64, scratch_operands = 1 : i64, tpu.core_type = #tpu.core_type<tc>, window_params = [{pipeline_mode = #tpu.pipeline_mode<synchronous>, transform_indices = @transform_0, window_bounds = array<i64: 36, 128>}, {pipeline_mode = #tpu.pipeline_mode<synchronous>, transform_indices = @transform_1, window_bounds = array<i64: 4, 128>}, {pipeline_mode = #tpu.pipeline_mode<synchronous>, transform_indices = @transform_2, window_bounds = array<i64: 8, 36>}, {pipeline_mode = #tpu.pipeline_mode<synchronous>, transform_indices = @transform_3, window_bounds = array<i64: 8, 1>}, {pipeline_mode = #tpu.pipeline_mode<synchronous>, transform_indices = @transform_4, window_bounds = array<i64: 8, 72>}, {pipeline_mode = #tpu.pipeline_mode<synchronous>, transform_indices = @transform_5, window_bounds = array<i64: 8, 1>}, {pipeline_mode = #tpu.pipeline_mode<synchronous>, transform_indices = @transform_6, window_bounds = array<i64: 8, 8>}, {pipeline_mode = #tpu.pipeline_mode<synchronous>, transform_indices = @transform_7, window_bounds = array<i64: 8, 1>}, {pipeline_mode = #tpu.pipeline_mode<synchronous>, transform_indices = @transform_8, window_bounds = array<i64: 8, 8>}, {pipeline_mode = #tpu.pipeline_mode<synchronous>, transform_indices = @transform_9, window_bounds = array<i64: 8, 4>}, {pipeline_mode = #tpu.pipeline_mode<synchronous>, transform_indices = @transform_10, window_bounds = array<i64: 8, 1>}, {pipeline_mode = #tpu.pipeline_mode<synchronous>, transform_indices = @transform_11, window_bounds = array<i64: 9, 128>}, {pipeline_mode = #tpu.pipeline_mode<synchronous>, transform_indices = @transform_12, window_bounds = array<i64: 128, 2>}, {pipeline_mode = #tpu.pipeline_mode<synchronous>, transform_indices = @transform_13, window_bounds = array<i64: 2, 128>}, {pipeline_mode = #tpu.pipeline_mode<synchronous>, transform_indices = @transform_14, window_bounds = array<i64: 8, 128>}]} {
    %c0 = arith.constant 0 : index
    %c0_0 = arith.constant 0 : index
    %0 = vector.load %arg3[%c0, %c0_0] : memref<8x36xf32, #tpu.memory_space<vmem>>, vector<8x36xf32>
    %c0_1 = arith.constant 0 : index
    %c0_2 = arith.constant 0 : index
    %1 = vector.load %arg1[%c0_1, %c0_2] : memref<36x128xf32, #tpu.memory_space<vmem>>, vector<36x128xf32>
    %cst = arith.constant dense<0.000000e+00> : vector<8x128xf32>
    %2 = tpu.matmul %0, %1, %cst {dimension_numbers = #tpu.dot_dimension_numbers<[1], [0], [0], [1], [0, 0, 1, 1], [], []>} : vector<8x36xf32>, vector<36x128xf32>, vector<8x128xf32> -> vector<8x128xf32>
    %c0_3 = arith.constant 0 : index
    %c0_4 = arith.constant 0 : index
    %3 = vector.load %arg4[%c0_3, %c0_4] : memref<8x1xf32, #tpu.memory_space<vmem>>, vector<8x1xf32>
    %4 = vector.broadcast %3 : vector<8x1xf32> to vector<8x128xf32>
    %5 = arith.addf %2, %4 : vector<8x128xf32>
    %cst_5 = arith.constant 0.000000e+00 : f32
    %6 = vector.broadcast %cst_5 : f32 to vector<8x128xf32>
    %7 = arith.cmpf ogt, %5, %6 : vector<8x128xf32>
    %cst_6 = arith.constant 0.00999999977 : f32
    %8 = vector.broadcast %cst_6 : f32 to vector<8x128xf32>
    %9 = arith.mulf %8, %5 : vector<8x128xf32>
    %10 = arith.select %7, %5, %9 : vector<8x128xi1>, vector<8x128xf32>
    %c9_i32 = arith.constant 9 : i32
    %11 = tpu.dynamic_rotate %10 by %c9_i32 dim 1 : vector<8x128xf32>, i32 -> vector<8x128xf32>
    %c0_7 = arith.constant 0 : index
    %c0_8 = arith.constant 0 : index
    %12 = vector.load %arg12[%c0_7, %c0_8] : memref<9x128xf32, #tpu.memory_space<vmem>>, vector<1x128xf32>
    %13 = vector.broadcast %12 : vector<1x128xf32> to vector<8x128xf32>
    %14 = arith.mulf %11, %13 : vector<8x128xf32>
    %c0_9 = arith.constant 0 : index
    %c0_10 = arith.constant 0 : index
    %15 = vector.load %arg16[%c0_9, %c0_10] : memref<72x128xf32, #tpu.memory_space<vmem>>, vector<8x128xf32>
    tpu.vector_store %arg16[%c0_9, %c0_10], %14 {strides = array<i32>} : memref<72x128xf32, #tpu.memory_space<vmem>>, vector<8x128xf32>,
    %c8_i32 = arith.constant 8 : i32
    %16 = tpu.dynamic_rotate %10 by %c8_i32 dim 1 : vector<8x128xf32>, i32 -> vector<8x128xf32>
    %c1 = arith.constant 1 : index
    %c0_11 = arith.constant 0 : index
    %17 = vector.load %arg12[%c1, %c0_11] : memref<9x128xf32, #tpu.memory_space<vmem>>, vector<1x128xf32>
    %18 = vector.broadcast %17 : vector<1x128xf32> to vector<8x128xf32>
    %19 = arith.mulf %16, %18 : vector<8x128xf32>
    %c8 = arith.constant 8 : index
    %c0_12 = arith.constant 0 : index
    %20 = vector.load %arg16[%c8, %c0_12] : memref<72x128xf32, #tpu.memory_space<vmem>>, vector<8x128xf32>
    tpu.vector_store %arg16[%c8, %c0_12], %19 {strides = array<i32>} : memref<72x128xf32, #tpu.memory_space<vmem>>, vector<8x128xf32>,
    %c7_i32 = arith.constant 7 : i32
    %21 = tpu.dynamic_rotate %10 by %c7_i32 dim 1 : vector<8x128xf32>, i32 -> vector<8x128xf32>
    %c2 = arith.constant 2 : index
    %c0_13 = arith.constant 0 : index
    %22 = vector.load %arg12[%c2, %c0_13] : memref<9x128xf32, #tpu.memory_space<vmem>>, vector<1x128xf32>
    %23 = vector.broadcast %22 : vector<1x128xf32> to vector<8x128xf32>
    %24 = arith.mulf %21, %23 : vector<8x128xf32>
    %c16 = arith.constant 16 : index
    %c0_14 = arith.constant 0 : index
    %25 = vector.load %arg16[%c16, %c0_14] : memref<72x128xf32, #tpu.memory_space<vmem>>, vector<8x128xf32>
    tpu.vector_store %arg16[%c16, %c0_14], %24 {strides = array<i32>} : memref<72x128xf32, #tpu.memory_space<vmem>>, vector<8x128xf32>,
    %c1_i32 = arith.constant 1 : i32
    %26 = tpu.dynamic_rotate %10 by %c1_i32 dim 1 : vector<8x128xf32>, i32 -> vector<8x128xf32>
    %c3 = arith.constant 3 : index
    %c0_15 = arith.constant 0 : index
    %27 = vector.load %arg12[%c3, %c0_15] : memref<9x128xf32, #tpu.memory_space<vmem>>, vector<1x128xf32>
    %28 = vector.broadcast %27 : vector<1x128xf32> to vector<8x128xf32>
    %29 = arith.mulf %26, %28 : vector<8x128xf32>
    %c24 = arith.constant 24 : index
    %c0_16 = arith.constant 0 : index
    %30 = vector.load %arg16[%c24, %c0_16] : memref<72x128xf32, #tpu.memory_space<vmem>>, vector<8x128xf32>
    tpu.vector_store %arg16[%c24, %c0_16], %29 {strides = array<i32>} : memref<72x128xf32, #tpu.memory_space<vmem>>, vector<8x128xf32>,
    %c4 = arith.constant 4 : index
    %c0_17 = arith.constant 0 : index
    %31 = vector.load %arg12[%c4, %c0_17] : memref<9x128xf32, #tpu.memory_space<vmem>>, vector<1x128xf32>
    %32 = vector.broadcast %31 : vector<1x128xf32> to vector<8x128xf32>
    %33 = arith.mulf %10, %32 : vector<8x128xf32>
    %c32 = arith.constant 32 : index
    %c0_18 = arith.constant 0 : index
    %34 = vector.load %arg16[%c32, %c0_18] : memref<72x128xf32, #tpu.memory_space<vmem>>, vector<8x128xf32>
    tpu.vector_store %arg16[%c32, %c0_18], %33 {strides = array<i32>} : memref<72x128xf32, #tpu.memory_space<vmem>>, vector<8x128xf32>,
    %c127_i32 = arith.constant 127 : i32
    %35 = tpu.dynamic_rotate %10 by %c127_i32 dim 1 : vector<8x128xf32>, i32 -> vector<8x128xf32>
    %c5 = arith.constant 5 : index
    %c0_19 = arith.constant 0 : index
    %36 = vector.load %arg12[%c5, %c0_19] : memref<9x128xf32, #tpu.memory_space<vmem>>, vector<1x128xf32>
    %37 = vector.broadcast %36 : vector<1x128xf32> to vector<8x128xf32>
    %38 = arith.mulf %35, %37 : vector<8x128xf32>
    %c40 = arith.constant 40 : index
    %c0_20 = arith.constant 0 : index
    %39 = vector.load %arg16[%c40, %c0_20] : memref<72x128xf32, #tpu.memory_space<vmem>>, vector<8x128xf32>
    tpu.vector_store %arg16[%c40, %c0_20], %38 {strides = array<i32>} : memref<72x128xf32, #tpu.memory_space<vmem>>, vector<8x128xf32>,
    %c121_i32 = arith.constant 121 : i32
    %40 = tpu.dynamic_rotate %10 by %c121_i32 dim 1 : vector<8x128xf32>, i32 -> vector<8x128xf32>
    %c6 = arith.constant 6 : index
    %c0_21 = arith.constant 0 : index
    %41 = vector.load %arg12[%c6, %c0_21] : memref<9x128xf32, #tpu.memory_space<vmem>>, vector<1x128xf32>
    %42 = vector.broadcast %41 : vector<1x128xf32> to vector<8x128xf32>
    %43 = arith.mulf %40, %42 : vector<8x128xf32>
    %c48 = arith.constant 48 : index
    %c0_22 = arith.constant 0 : index
    %44 = vector.load %arg16[%c48, %c0_22] : memref<72x128xf32, #tpu.memory_space<vmem>>, vector<8x128xf32>
    tpu.vector_store %arg16[%c48, %c0_22], %43 {strides = array<i32>} : memref<72x128xf32, #tpu.memory_space<vmem>>, vector<8x128xf32>,
    %c120_i32 = arith.constant 120 : i32
    %45 = tpu.dynamic_rotate %10 by %c120_i32 dim 1 : vector<8x128xf32>, i32 -> vector<8x128xf32>
    %c7 = arith.constant 7 : index
    %c0_23 = arith.constant 0 : index
    %46 = vector.load %arg12[%c7, %c0_23] : memref<9x128xf32, #tpu.memory_space<vmem>>, vector<1x128xf32>
    %47 = vector.broadcast %46 : vector<1x128xf32> to vector<8x128xf32>
    %48 = arith.mulf %45, %47 : vector<8x128xf32>
    %c56 = arith.constant 56 : index
    %c0_24 = arith.constant 0 : index
    %49 = vector.load %arg16[%c56, %c0_24] : memref<72x128xf32, #tpu.memory_space<vmem>>, vector<8x128xf32>
    tpu.vector_store %arg16[%c56, %c0_24], %48 {strides = array<i32>} : memref<72x128xf32, #tpu.memory_space<vmem>>, vector<8x128xf32>,
    %c119_i32 = arith.constant 119 : i32
    %50 = tpu.dynamic_rotate %10 by %c119_i32 dim 1 : vector<8x128xf32>, i32 -> vector<8x128xf32>
    %c8_25 = arith.constant 8 : index
    %c0_26 = arith.constant 0 : index
    %51 = vector.load %arg12[%c8_25, %c0_26] : memref<9x128xf32, #tpu.memory_space<vmem>>, vector<1x128xf32>
    %52 = vector.broadcast %51 : vector<1x128xf32> to vector<8x128xf32>
    %53 = arith.mulf %50, %52 : vector<8x128xf32>
    %c64 = arith.constant 64 : index
    %c0_27 = arith.constant 0 : index
    %54 = vector.load %arg16[%c64, %c0_27] : memref<72x128xf32, #tpu.memory_space<vmem>>, vector<8x128xf32>
    tpu.vector_store %arg16[%c64, %c0_27], %53 {strides = array<i32>} : memref<72x128xf32, #tpu.memory_space<vmem>>, vector<8x128xf32>,
    %c0_28 = arith.constant 0 : index
    %c0_29 = arith.constant 0 : index
    %55 = vector.load %arg5[%c0_28, %c0_29] : memref<8x72xf32, #tpu.memory_space<vmem>>, vector<8x72xf32>
    %c0_30 = arith.constant 0 : index
    %c0_31 = arith.constant 0 : index
    %56 = vector.load %arg16[%c0_30, %c0_31] : memref<72x128xf32, #tpu.memory_space<vmem>>, vector<72x128xf32>
    %cst_32 = arith.constant dense<0.000000e+00> : vector<8x128xf32>
    %57 = tpu.matmul %55, %56, %cst_32 {dimension_numbers = #tpu.dot_dimension_numbers<[1], [0], [0], [1], [0, 0, 1, 1], [], []>} : vector<8x72xf32>, vector<72x128xf32>, vector<8x128xf32> -> vector<8x128xf32>
    %c0_33 = arith.constant 0 : index
    %c0_34 = arith.constant 0 : index
    %58 = vector.load %arg6[%c0_33, %c0_34] : memref<8x1xf32, #tpu.memory_space<vmem>>, vector<8x1xf32>
    %59 = vector.broadcast %58 : vector<8x1xf32> to vector<8x128xf32>
    %60 = arith.addf %57, %59 : vector<8x128xf32>
    %c0_35 = arith.constant 0 : index
    %c0_36 = arith.constant 0 : index
    %61 = vector.load %arg7[%c0_35, %c0_36] : memref<8x8xf32, #tpu.memory_space<vmem>>, vector<8x8xf32>
    %62 = arith.mulf %60, %60 : vector<8x128xf32>
    %cst_37 = arith.constant dense<0.000000e+00> : vector<8x128xf32>
    %63 = tpu.matmul %61, %62, %cst_37 {dimension_numbers = #tpu.dot_dimension_numbers<[1], [0], [0], [1], [0, 0, 1, 1], [], []>} : vector<8x8xf32>, vector<8x128xf32>, vector<8x128xf32> -> vector<8x128xf32>
    %c0_38 = arith.constant 0 : index
    %c0_39 = arith.constant 0 : index
    %64 = vector.load %arg8[%c0_38, %c0_39] : memref<8x1xf32, #tpu.memory_space<vmem>>, vector<8x1xf32>
    %65 = vector.broadcast %64 : vector<8x1xf32> to vector<8x128xf32>
    %66 = arith.addf %63, %65 : vector<8x128xf32>
    %67 = math.rsqrt %66 : vector<8x128xf32>
    %68 = arith.mulf %60, %67 : vector<8x128xf32>
    %c0_40 = arith.constant 0 : index
    %c0_41 = arith.constant 0 : index
    %69 = vector.load %arg13[%c0_40, %c0_41] : memref<128x2xf32, #tpu.memory_space<vmem>>, vector<128x2xf32>
    %cst_42 = arith.constant dense<0.000000e+00> : vector<8x2xf32>
    %70 = tpu.matmul %68, %69, %cst_42 {dimension_numbers = #tpu.dot_dimension_numbers<[1], [0], [0], [1], [0, 0, 1, 1], [], []>} : vector<8x128xf32>, vector<128x2xf32>, vector<8x2xf32> -> vector<8x2xf32>
    %c0_43 = arith.constant 0 : index
    %c0_44 = arith.constant 0 : index
    %71 = vector.load %arg9[%c0_43, %c0_44] : memref<8x8xf32, #tpu.memory_space<vmem>>, vector<8x8xf32>
    %cst_45 = arith.constant dense<0.000000e+00> : vector<8x2xf32>
    %72 = tpu.matmul %71, %70, %cst_45 {dimension_numbers = #tpu.dot_dimension_numbers<[1], [0], [0], [1], [0, 0, 1, 1], [], []>} : vector<8x8xf32>, vector<8x2xf32>, vector<8x2xf32> -> vector<8x2xf32>
    %73 = arith.negf %72 : vector<8x2xf32>
    %74 = math.exp %73 : vector<8x2xf32>
    %cst_46 = arith.constant 1.000000e+00 : f32
    %75 = vector.broadcast %cst_46 : f32 to vector<8x2xf32>
    %76 = arith.addf %75, %74 : vector<8x2xf32>
    %77 = arith.divf %75, %76 : vector<8x2xf32>
    %c0_47 = arith.constant 0 : index
    %c0_48 = arith.constant 0 : index
    %78 = vector.load %arg14[%c0_47, %c0_48] : memref<2x128xf32, #tpu.memory_space<vmem>>, vector<2x128xf32>
    %cst_49 = arith.constant dense<0.000000e+00> : vector<8x128xf32>
    %79 = tpu.matmul %77, %78, %cst_49 {dimension_numbers = #tpu.dot_dimension_numbers<[1], [0], [0], [1], [0, 0, 1, 1], [], []>} : vector<8x2xf32>, vector<2x128xf32>, vector<8x128xf32> -> vector<8x128xf32>
    %80 = arith.mulf %68, %79 : vector<8x128xf32>
    %c0_50 = arith.constant 0 : index
    %c0_51 = arith.constant 0 : index
    %81 = vector.load %arg10[%c0_50, %c0_51] : memref<8x4xf32, #tpu.memory_space<vmem>>, vector<8x4xf32>
    %c0_52 = arith.constant 0 : index
    %c0_53 = arith.constant 0 : index
    %82 = vector.load %arg2[%c0_52, %c0_53] : memref<4x128xf32, #tpu.memory_space<vmem>>, vector<4x128xf32>
    %cst_54 = arith.constant dense<0.000000e+00> : vector<8x128xf32>
    %83 = tpu.matmul %81, %82, %cst_54 {dimension_numbers = #tpu.dot_dimension_numbers<[1], [0], [0], [1], [0, 0, 1, 1], [], []>} : vector<8x4xf32>, vector<4x128xf32>, vector<8x128xf32> -> vector<8x128xf32>
    %c0_55 = arith.constant 0 : index
    %c0_56 = arith.constant 0 : index
    %84 = vector.load %arg11[%c0_55, %c0_56] : memref<8x1xf32, #tpu.memory_space<vmem>>, vector<8x1xf32>
    %85 = vector.broadcast %84 : vector<8x1xf32> to vector<8x128xf32>
    %86 = arith.addf %83, %85 : vector<8x128xf32>
    %87 = arith.addf %80, %86 : vector<8x128xf32>
    %c0_57 = arith.constant 0 : index
    %c0_58 = arith.constant 0 : index
    %88 = vector.load %arg15[%c0_57, %c0_58] : memref<8x128xf32, #tpu.memory_space<vmem>>, vector<8x128xf32>
    tpu.vector_store %arg15[%c0_57, %c0_58], %87 {strides = array<i32>} : memref<8x128xf32, #tpu.memory_space<vmem>>, vector<8x128xf32>,
    return
  }
  func.func @transform_0(%arg0: i32) -> (i32, i32) {
    %c0_i32 = arith.constant 0 : i32
    %c0_i32_0 = arith.constant 0 : i32
    %c0_i32_1 = arith.constant 0 : i32
    return %c0_i32, %c0_i32_0 : i32, i32
  }
  func.func @transform_1(%arg0: i32) -> (i32, i32) {
    %c0_i32 = arith.constant 0 : i32
    %c0_i32_0 = arith.constant 0 : i32
    %c0_i32_1 = arith.constant 0 : i32
    return %c0_i32, %c0_i32_0 : i32, i32
  }
  func.func @transform_2(%arg0: i32) -> (i32, i32) {
    %c0_i32 = arith.constant 0 : i32
    %c0_i32_0 = arith.constant 0 : i32
    %c0_i32_1 = arith.constant 0 : i32
    return %c0_i32, %c0_i32_0 : i32, i32
  }
  func.func @transform_3(%arg0: i32) -> (i32, i32) {
    %c0_i32 = arith.constant 0 : i32
    %c0_i32_0 = arith.constant 0 : i32
    %c0_i32_1 = arith.constant 0 : i32
    return %c0_i32, %c0_i32_0 : i32, i32
  }
  func.func @transform_4(%arg0: i32) -> (i32, i32) {
    %c0_i32 = arith.constant 0 : i32
    %c0_i32_0 = arith.constant 0 : i32
    %c0_i32_1 = arith.constant 0 : i32
    return %c0_i32, %c0_i32_0 : i32, i32
  }
  func.func @transform_5(%arg0: i32) -> (i32, i32) {
    %c0_i32 = arith.constant 0 : i32
    %c0_i32_0 = arith.constant 0 : i32
    %c0_i32_1 = arith.constant 0 : i32
    return %c0_i32, %c0_i32_0 : i32, i32
  }
  func.func @transform_6(%arg0: i32) -> (i32, i32) {
    %c0_i32 = arith.constant 0 : i32
    %c0_i32_0 = arith.constant 0 : i32
    %c0_i32_1 = arith.constant 0 : i32
    return %c0_i32, %c0_i32_0 : i32, i32
  }
  func.func @transform_7(%arg0: i32) -> (i32, i32) {
    %c0_i32 = arith.constant 0 : i32
    %c0_i32_0 = arith.constant 0 : i32
    %c0_i32_1 = arith.constant 0 : i32
    return %c0_i32, %c0_i32_0 : i32, i32
  }
  func.func @transform_8(%arg0: i32) -> (i32, i32) {
    %c0_i32 = arith.constant 0 : i32
    %c0_i32_0 = arith.constant 0 : i32
    %c0_i32_1 = arith.constant 0 : i32
    return %c0_i32, %c0_i32_0 : i32, i32
  }
  func.func @transform_9(%arg0: i32) -> (i32, i32) {
    %c0_i32 = arith.constant 0 : i32
    %c0_i32_0 = arith.constant 0 : i32
    %c0_i32_1 = arith.constant 0 : i32
    return %c0_i32, %c0_i32_0 : i32, i32
  }
  func.func @transform_10(%arg0: i32) -> (i32, i32) {
    %c0_i32 = arith.constant 0 : i32
    %c0_i32_0 = arith.constant 0 : i32
    %c0_i32_1 = arith.constant 0 : i32
    return %c0_i32, %c0_i32_0 : i32, i32
  }
  func.func @transform_11(%arg0: i32) -> (i32, i32) {
    %c0_i32 = arith.constant 0 : i32
    %c0_i32_0 = arith.constant 0 : i32
    %c0_i32_1 = arith.constant 0 : i32
    return %c0_i32, %c0_i32_0 : i32, i32
  }
  func.func @transform_12(%arg0: i32) -> (i32, i32) {
    %c0_i32 = arith.constant 0 : i32
    %c0_i32_0 = arith.constant 0 : i32
    %c0_i32_1 = arith.constant 0 : i32
    return %c0_i32, %c0_i32_0 : i32, i32
  }
  func.func @transform_13(%arg0: i32) -> (i32, i32) {
    %c0_i32 = arith.constant 0 : i32
    %c0_i32_0 = arith.constant 0 : i32
    %c0_i32_1 = arith.constant 0 : i32
    return %c0_i32, %c0_i32_0 : i32, i32
  }
  func.func @transform_14(%arg0: i32) -> (i32, i32) {
    %c0_i32 = arith.constant 0 : i32
    %c0_i32_0 = arith.constant 0 : i32
    %c0_i32_1 = arith.constant 0 : i32
    return %c0_i32, %c0_i32_0 : i32, i32
  }
}

</mosaic_0001>

<llo_original>
// kernel: res_block_down_forward.1
$region0: #{res_block_down_forward.1}
  #allocation0 [shape = 'u32[]', space=smem, size = 0x4, offset = 0x4, fixed_abs, tag = 'smem constant byte address 0x4 - core index']
  #allocation1 [shape = 'u32[144,128]{1,0:T(1,128)}', space=vmem, size = 0x12000, scoped, tag = 'internal scratch']
  #allocation2 [shape = 'f32[72,128]{1,0:T(8,128)}', space=vmem, size = 0x9000, scoped, tag = 'scratch operand']
  %s0 = inlined_call_operand.vmem [shape: f32[36,128], index: 0, kind: input, shape index: {}]
  %s1 = inlined_call_operand.vmem [shape: f32[4,128], index: 1, kind: input, shape index: {}]
  %s2 = inlined_call_operand.vmem [shape: f32[8,36], index: 2, kind: input, shape index: {}]
  %s3 = inlined_call_operand.vmem [shape: f32[8,1], index: 3, kind: input, shape index: {}]
  %s4 = inlined_call_operand.vmem [shape: f32[8,72], index: 4, kind: input, shape index: {}]
  %s5 = inlined_call_operand.vmem [shape: f32[8,1], index: 5, kind: input, shape index: {}]
  %s6 = inlined_call_operand.vmem [shape: f32[8,8], index: 6, kind: input, shape index: {}]
  %s7 = inlined_call_operand.vmem [shape: f32[8,1], index: 7, kind: input, shape index: {}]
  %s8 = inlined_call_operand.vmem [shape: f32[8,8], index: 8, kind: input, shape index: {}]
  %s9 = inlined_call_operand.vmem [shape: f32[8,4], index: 9, kind: input, shape index: {}]
  %s10 = inlined_call_operand.vmem [shape: f32[8,1], index: 10, kind: input, shape index: {}]
  %s11 = inlined_call_operand.vmem [shape: f32[9,128], index: 11, kind: input, shape index: {}]
  %s12 = inlined_call_operand.vmem [shape: f32[128,2], index: 12, kind: input, shape index: {}]
  %s13 = inlined_call_operand.vmem [shape: f32[2,128], index: 13, kind: input, shape index: {}]
  %s14 = inlined_call_operand.vmem [shape: f32[8,128], index: 14, kind: output, shape index: {}]
  %s15 = sld [smem:[#allocation0]]
  $region66: #{res_block_down_forward.1} parent=0
    _
  %s17 = ssub.s32 1, %s15
  %s18 = scalar_select 0, %s17, %s15
  // Predicated region
  $region2: #{res_block_down_forward.1} parent=0 // pred_check
    _
  $region3: #{res_block_down_forward.1} parent=0 // pred_check_branch
    %20 = sbr.rel (0) target = $region5
  $region4: #{res_block_down_forward.1} parent=0 // pred_region
    _
  $region5: #{res_block_down_forward.1} parent=0 // pred_fallthru
    _
  // Predicated region
  $region6: #{res_block_down_forward.1} parent=0 // pred_check
    _
  $region7: #{res_block_down_forward.1} parent=0 // pred_check_branch
    %22 = sbr.rel (0) target = $region9
  $region8: #{res_block_down_forward.1} parent=0 // pred_region
    _
  $region9: #{res_block_down_forward.1} parent=0 // pred_fallthru
    _
  // Predicated region
  $region10: #{res_block_down_forward.1} parent=0 // pred_check
    _
  $region11: #{res_block_down_forward.1} parent=0 // pred_check_branch
    %24 = sbr.rel (0) target = $region13
  $region12: #{res_block_down_forward.1} parent=0 // pred_region
    _
  $region13: #{res_block_down_forward.1} parent=0 // pred_fallthru
    _
  // Predicated region
  $region14: #{res_block_down_forward.1} parent=0 // pred_check
    _
  $region15: #{res_block_down_forward.1} parent=0 // pred_check_branch
    %26 = sbr.rel (0) target = $region17
  $region16: #{res_block_down_forward.1} parent=0 // pred_region
    _
  $region17: #{res_block_down_forward.1} parent=0 // pred_fallthru
    _
  // Predicated region
  $region18: #{res_block_down_forward.1} parent=0 // pred_check
    _
  $region19: #{res_block_down_forward.1} parent=0 // pred_check_branch
    %28 = sbr.rel (0) target = $region21
  $region20: #{res_block_down_forward.1} parent=0 // pred_region
    _
  $region21: #{res_block_down_forward.1} parent=0 // pred_fallthru
    _
  // Predicated region
  $region22: #{res_block_down_forward.1} parent=0 // pred_check
    _
  $region23: #{res_block_down_forward.1} parent=0 // pred_check_branch
    %30 = sbr.rel (0) target = $region25
  $region24: #{res_block_down_forward.1} parent=0 // pred_region
    _
  $region25: #{res_block_down_forward.1} parent=0 // pred_fallthru
    _
  // Predicated region
  $region26: #{res_block_down_forward.1} parent=0 // pred_check
    _
  $region27: #{res_block_down_forward.1} parent=0 // pred_check_branch
    %32 = sbr.rel (0) target = $region29
  $region28: #{res_block_down_forward.1} parent=0 // pred_region
    _
  $region29: #{res_block_down_forward.1} parent=0 // pred_fallthru
    _
  // Predicated region
  $region30: #{res_block_down_forward.1} parent=0 // pred_check
    _
  $region31: #{res_block_down_forward.1} parent=0 // pred_check_branch
    %34 = sbr.rel (0) target = $region33
  $region32: #{res_block_down_forward.1} parent=0 // pred_region
    _
  $region33: #{res_block_down_forward.1} parent=0 // pred_fallthru
    _
  // Predicated region
  $region34: #{res_block_down_forward.1} parent=0 // pred_check
    _
  $region35: #{res_block_down_forward.1} parent=0 // pred_check_branch
    %36 = sbr.rel (0) target = $region37
  $region36: #{res_block_down_forward.1} parent=0 // pred_region
    _
  $region37: #{res_block_down_forward.1} parent=0 // pred_fallthru
    _
  // Predicated region
  $region38: #{res_block_down_forward.1} parent=0 // pred_check
    _
  $region39: #{res_block_down_forward.1} parent=0 // pred_check_branch
    %38 = sbr.rel (0) target = $region41
  $region40: #{res_block_down_forward.1} parent=0 // pred_region
    _
  $region41: #{res_block_down_forward.1} parent=0 // pred_fallthru
    _
  // Predicated region
  $region42: #{res_block_down_forward.1} parent=0 // pred_check
    _
  $region43: #{res_block_down_forward.1} parent=0 // pred_check_branch
    %40 = sbr.rel (0) target = $region45
  $region44: #{res_block_down_forward.1} parent=0 // pred_region
    _
  $region45: #{res_block_down_forward.1} parent=0 // pred_fallthru
    _
  // Predicated region
  $region46: #{res_block_down_forward.1} parent=0 // pred_check
    _
  $region47: #{res_block_down_forward.1} parent=0 // pred_check_branch
    %42 = sbr.rel (0) target = $region49
  $region48: #{res_block_down_forward.1} parent=0 // pred_region
    _
  $region49: #{res_block_down_forward.1} parent=0 // pred_fallthru
    _
  // Predicated region
  $region50: #{res_block_down_forward.1} parent=0 // pred_check
    _
  $region51: #{res_block_down_forward.1} parent=0 // pred_check_branch
    %44 = sbr.rel (0) target = $region53
  $region52: #{res_block_down_forward.1} parent=0 // pred_region
    _
  $region53: #{res_block_down_forward.1} parent=0 // pred_fallthru
    _
  // Predicated region
  $region54: #{res_block_down_forward.1} parent=0 // pred_check
    _
  $region55: #{res_block_down_forward.1} parent=0 // pred_check_branch
    %46 = sbr.rel (0) target = $region57
  $region56: #{res_block_down_forward.1} parent=0 // pred_region
    _
  $region57: #{res_block_down_forward.1} parent=0 // pred_fallthru
    _
  %v47 = vld [vmem:[%s2] sm:$0xff]
  %v48 = vld [vmem:[%s0] sm:$0xff]
  %v49 = vld [vmem:[%s0 + $0x8] sm:$0xff]
  %v50 = vld [vmem:[%s0 + $0x10] sm:$0xff]
  %v51 = vld [vmem:[%s0 + $0x18] sm:$0xff]
  %v52 = vld [vmem:[%s0 + $0x20] sm:$0xf]
  %v53 = vld [vmem:[%s3] sm:$0xff]
  %55 = vset.pattern.permute.xlu0 0
  %56 = vperm.xlu0 %55, %v53
  %v57 = vpop.permute.xlu0 %56
  %vm59 = vcmask 293888
  %v61 = vsel %vm59, %v47, 0
  %vm63 = vcmask 1043456
  %v65 = vsel %vm63, %v52, 0
  %67 = vmatprep.subr.mxu0 0.0
  %68 = vmatpush1.msra.mxu0 0.0
  %69 = vmatprep.subr.mxu0 0.0
  %70 = vmatpush1.msra.mxu0 0.0
  %71 = vmatprep.subr.mxu0 0.0
  %72 = vmatpush1.msra.mxu0 0.0
  %73 = vmatprep.subr.mxu0 0.0
  %74 = vmatpush1.msra.mxu0 0.0
  %75 = vmatprep.subr.mxu0 0.0
  %76 = vmatpush1.msra.mxu0 0.0
  %77 = vmatprep.subr.mxu0 0.0
  %78 = vmatpush1.msra.mxu0 0.0
  %79 = vmatprep.subr.mxu0 0.0
  %80 = vmatpush1.msra.mxu0 0.0
  %81 = vmatprep.subr.mxu0 0.0
  %82 = vmatpush1.msra.mxu0 0.0
  %83 = vmatprep.subr.mxu0 0.0
  %84 = vmatpush1.msra.mxu0 0.0
  %85 = vmatprep.subr.mxu0 0.0
  %86 = vmatpush1.msra.mxu0 0.0
  %87 = vmatprep.subr.mxu0 0.0
  %88 = vmatpush1.msra.mxu0 0.0
  %89 = vmatprep.subr.mxu0 0.0
  %90 = vmatpush1.msra.mxu0 %v65
  %91 = vmatprep.subr.mxu0 0.0
  %92 = vmatpush1.msra.mxu0 %v51
  %93 = vmatprep.subr.mxu0 0.0
  %94 = vmatpush1.msra.mxu0 %v50
  %95 = vmatprep.subr.mxu0 0.0
  %96 = vmatpush1.msra.mxu0 %v49
  %97 = vmatprep.subr.mxu0 0.0
  %98 = vmatpush1.msra.mxu0 %v48
  %99 = vmatprep.subr.mxu0 0.0
  %100 = vmatpush2.msra.mxu0 0.0
  %101 = vmatprep.subr.mxu0 0.0
  %102 = vmatpush2.msra.mxu0 0.0
  %103 = vmatprep.subr.mxu0 0.0
  %104 = vmatpush2.msra.mxu0 0.0
  %105 = vmatprep.subr.mxu0 0.0
  %106 = vmatpush2.msra.mxu0 0.0
  %107 = vmatprep.subr.mxu0 0.0
  %108 = vmatpush2.msra.mxu0 0.0
  %109 = vmatprep.subr.mxu0 0.0
  %110 = vmatpush2.msra.mxu0 0.0
  %111 = vmatprep.subr.mxu0 0.0
  %112 = vmatpush2.msra.mxu0 0.0
  %113 = vmatprep.subr.mxu0 0.0
  %114 = vmatpush2.msra.mxu0 0.0
  %115 = vmatprep.subr.mxu0 0.0
  %116 = vmatpush2.msra.mxu0 0.0
  %117 = vmatprep.subr.mxu0 0.0
  %118 = vmatpush2.msra.mxu0 0.0
  %119 = vmatprep.subr.mxu0 0.0
  %120 = vmatpush2.msra.mxu0 0.0
  %121 = vmatprep.subr.mxu0 0.0
  %122 = vmatpush2.msra.mxu0 0.0
  %123 = vmatprep.subr.mxu0 0.0
  %124 = vmatpush2.msra.mxu0 0.0
  %125 = vmatprep.subr.mxu0 0.0
  %126 = vmatpush2.msra.mxu0 0.0
  %127 = vmatprep.subr.mxu0 0.0
  %128 = vmatpush2.msra.mxu0 0.0
  %129 = vmatprep.subr.mxu0 0.0
  %130 = vmatpush2.msra.mxu0 0.0
  %131 = vmatprep.mubr.f32.mxu0 0.0
  %132 = vmatmul.mubr.f32.gmra.mxu0 %v61
  %v133 = vpop.f32.mrf.mxu0
  %v134 = vadd.f32 %v57, %v133
  %v135 = vpop.f32.mrf.mxu0
  %136 = vdwg.mxu0
  %vm137 = vcmp.gt.f32.partialorder %v134, 0.0
  %v138 = vmul.f32 %v134, 0.01
  %v139 = vsel %vm137, %v134, %v138
  %140 = vrot.lane.b32.xlu0 %v139, 9
  %v141 = vpop.permute.xlu0 %140
  %v142 = vld [vmem:[%s11] sm:$0x1]
  %v143 = vlaneseq
  %v144 = vshrl.u32 %v143, 7
  %v145 = vsub.s32 0, %v144
  %v146 = vrot.slane %v142, %v145
  %v147 = vmul.f32 %v141, %v146
  %148 = vst [vmem:[#allocation2] sm:$0xff] %v147
  %149 = vrot.lane.b32.xlu0 %v139, 8
  %v150 = vpop.permute.xlu0 %149
  %v151 = vld [vmem:[%s11 + $0x1] sm:$0x1]
  %v152 = vlaneseq
  %v153 = vshrl.u32 %v152, 7
  %v154 = vsub.s32 0, %v153
  %v155 = vrot.slane %v151, %v154
  %v156 = vmul.f32 %v150, %v155
  %157 = vst [vmem:[#allocation2 + $0x8] sm:$0xff] %v156
  %158 = vrot.lane.b32.xlu0 %v139, 7
  %v159 = vpop.permute.xlu0 %158
  %v160 = vld [vmem:[%s11 + $0x2] sm:$0x1]
  %v161 = vlaneseq
  %v162 = vshrl.u32 %v161, 7
  %v163 = vsub.s32 0, %v162
  %v164 = vrot.slane %v160, %v163
  %v165 = vmul.f32 %v159, %v164
  %166 = vst [vmem:[#allocation2 + $0x10] sm:$0xff] %v165
  %167 = vrot.lane.b32.xlu0 %v139, 1
  %v168 = vpop.permute.xlu0 %167
  %v169 = vld [vmem:[%s11 + $0x3] sm:$0x1]
  %v170 = vlaneseq
  %v171 = vshrl.u32 %v170, 7
  %v172 = vsub.s32 0, %v171
  %v173 = vrot.slane %v169, %v172
  %v174 = vmul.f32 %v168, %v173
  %175 = vst [vmem:[#allocation2 + $0x18] sm:$0xff] %v174
  %v176 = vld [vmem:[%s11 + $0x4] sm:$0x1]
  %v177 = vlaneseq
  %v178 = vshrl.u32 %v177, 7
  %v179 = vsub.s32 0, %v178
  %v180 = vrot.slane %v176, %v179
  %v181 = vmul.f32 %v139, %v180
  %182 = vst [vmem:[#allocation2 + $0x20] sm:$0xff] %v181
  %183 = vrot.lane.b32.xlu0 %v139, 127
  %v184 = vpop.permute.xlu0 %183
  %v185 = vld [vmem:[%s11 + $0x5] sm:$0x1]
  %v186 = vlaneseq
  %v187 = vshrl.u32 %v186, 7
  %v188 = vsub.s32 0, %v187
  %v189 = vrot.slane %v185, %v188
  %v190 = vmul.f32 %v184, %v189
  %191 = vst [vmem:[#allocation2 + $0x28] sm:$0xff] %v190
  %192 = vrot.lane.b32.xlu0 %v139, 121
  %v193 = vpop.permute.xlu0 %192
  %v194 = vld [vmem:[%s11 + $0x6] sm:$0x1]
  %v195 = vlaneseq
  %v196 = vshrl.u32 %v195, 7
  %v197 = vsub.s32 0, %v196
  %v198 = vrot.slane %v194, %v197
  %v199 = vmul.f32 %v193, %v198
  %200 = vst [vmem:[#allocation2 + $0x30] sm:$0xff] %v199
  %201 = vrot.lane.b32.xlu0 %v139, 120
  %v202 = vpop.permute.xlu0 %201
  %v203 = vld [vmem:[%s11 + $0x7] sm:$0x1]
  %v204 = vlaneseq
  %v205 = vshrl.u32 %v204, 7
  %v206 = vsub.s32 0, %v205
  %v207 = vrot.slane %v203, %v206
  %v208 = vmul.f32 %v202, %v207
  %209 = vst [vmem:[#allocation2 + $0x38] sm:$0xff] %v208
  %210 = vrot.lane.b32.xlu0 %v139, 119
  %v211 = vpop.permute.xlu0 %210
  %v212 = vld [vmem:[%s11 + $0x8] sm:$0x1]
  %v213 = vlaneseq
  %v214 = vshrl.u32 %v213, 7
  %v215 = vsub.s32 0, %v214
  %v216 = vrot.slane %v212, %v215
  %v217 = vmul.f32 %v211, %v216
  %218 = vst [vmem:[#allocation2 + $0x40] sm:$0xff] %v217
  %v219 = vld [vmem:[%s4] sm:$0xff]
  %v220 = vld [vmem:[#allocation2] sm:$0xff]
  %v221 = vld [vmem:[#allocation2 + $0x8] sm:$0xff]
  %v222 = vld [vmem:[#allocation2 + $0x10] sm:$0xff]
  %v223 = vld [vmem:[#allocation2 + $0x18] sm:$0xff]
  %v224 = vld [vmem:[#allocation2 + $0x20] sm:$0xff]
  %v225 = vld [vmem:[#allocation2 + $0x28] sm:$0xff]
  %v226 = vld [vmem:[#allocation2 + $0x30] sm:$0xff]
  %v227 = vld [vmem:[#allocation2 + $0x38] sm:$0xff]
  %v228 = vld [vmem:[#allocation2 + $0x40] sm:$0xff]
  %v229 = vld [vmem:[%s5] sm:$0xff]
  %231 = vset.pattern.permute.xlu0 0
  %232 = vperm.xlu0 %231, %v229
  %v233 = vpop.permute.xlu0 %232
  %vm235 = vcmask 588800
  %v237 = vsel %vm235, %v219, 0
  %239 = vmatprep.subr.mxu0 0.0
  %240 = vmatpush1.msra.mxu0 0.0
  %241 = vmatprep.subr.mxu0 0.0
  %242 = vmatpush1.msra.mxu0 0.0
  %243 = vmatprep.subr.mxu0 0.0
  %244 = vmatpush1.msra.mxu0 0.0
  %245 = vmatprep.subr.mxu0 0.0
  %246 = vmatpush1.msra.mxu0 0.0
  %247 = vmatprep.subr.mxu0 0.0
  %248 = vmatpush1.msra.mxu0 0.0
  %249 = vmatprep.subr.mxu0 0.0
  %250 = vmatpush1.msra.mxu0 0.0
  %251 = vmatprep.subr.mxu0 0.0
  %252 = vmatpush1.msra.mxu0 0.0
  %253 = vmatprep.subr.mxu0 0.0
  %254 = vmatpush1.msra.mxu0 %v228
  %255 = vmatprep.subr.mxu0 0.0
  %256 = vmatpush1.msra.mxu0 %v227
  %257 = vmatprep.subr.mxu0 0.0
  %258 = vmatpush1.msra.mxu0 %v226
  %259 = vmatprep.subr.mxu0 0.0
  %260 = vmatpush1.msra.mxu0 %v225
  %261 = vmatprep.subr.mxu0 0.0
  %262 = vmatpush1.msra.mxu0 %v224
  %263 = vmatprep.subr.mxu0 0.0
  %264 = vmatpush1.msra.mxu0 %v223
  %265 = vmatprep.subr.mxu0 0.0
  %266 = vmatpush1.msra.mxu0 %v222
  %267 = vmatprep.subr.mxu0 0.0
  %268 = vmatpush1.msra.mxu0 %v221
  %269 = vmatprep.subr.mxu0 0.0
  %270 = vmatpush1.msra.mxu0 %v220
  %271 = vmatprep.subr.mxu0 0.0
  %272 = vmatpush2.msra.mxu0 0.0
  %273 = vmatprep.subr.mxu0 0.0
  %274 = vmatpush2.msra.mxu0 0.0
  %275 = vmatprep.subr.mxu0 0.0
  %276 = vmatpush2.msra.mxu0 0.0
  %277 = vmatprep.subr.mxu0 0.0
  %278 = vmatpush2.msra.mxu0 0.0
  %279 = vmatprep.subr.mxu0 0.0
  %280 = vmatpush2.msra.mxu0 0.0
  %281 = vmatprep.subr.mxu0 0.0
  %282 = vmatpush2.msra.mxu0 0.0
  %283 = vmatprep.subr.mxu0 0.0
  %284 = vmatpush2.msra.mxu0 0.0
  %285 = vmatprep.subr.mxu0 0.0
  %286 = vmatpush2.msra.mxu0 0.0
  %287 = vmatprep.subr.mxu0 0.0
  %288 = vmatpush2.msra.mxu0 0.0
  %289 = vmatprep.subr.mxu0 0.0
  %290 = vmatpush2.msra.mxu0 0.0
  %291 = vmatprep.subr.mxu0 0.0
  %292 = vmatpush2.msra.mxu0 0.0
  %293 = vmatprep.subr.mxu0 0.0
  %294 = vmatpush2.msra.mxu0 0.0
  %295 = vmatprep.subr.mxu0 0.0
  %296 = vmatpush2.msra.mxu0 0.0
  %297 = vmatprep.subr.mxu0 0.0
  %298 = vmatpush2.msra.mxu0 0.0
  %299 = vmatprep.subr.mxu0 0.0
  %300 = vmatpush2.msra.mxu0 0.0
  %301 = vmatprep.subr.mxu0 0.0
  %302 = vmatpush2.msra.mxu0 0.0
  %303 = vmatprep.mubr.f32.mxu0 0.0
  %304 = vmatmul.mubr.f32.gmra.mxu0 %v237
  %v305 = vpop.f32.mrf.mxu0
  %v306 = vadd.f32 %v233, %v305
  %v307 = vpop.f32.mrf.mxu0
  %308 = vdwg.mxu0
  %v309 = vld [vmem:[%s6] sm:$0xff]
  %v310 = vmul.f32 %v306, %v306
  %v311 = vld [vmem:[%s7] sm:$0xff]
  %313 = vset.pattern.permute.xlu0 0
  %314 = vperm.xlu0 %313, %v311
  %v315 = vpop.permute.xlu0 %314
  %vm317 = vcmask 64512
  %v319 = vsel %vm317, %v309, 0
  %321 = vmatprep.subr.mxu0 0.0
  %322 = vmatpush1.msra.mxu0 0.0
  %323 = vmatprep.subr.mxu0 0.0
  %324 = vmatpush1.msra.mxu0 0.0
  %325 = vmatprep.subr.mxu0 0.0
  %326 = vmatpush1.msra.mxu0 0.0
  %327 = vmatprep.subr.mxu0 0.0
  %328 = vmatpush1.msra.mxu0 0.0
  %329 = vmatprep.subr.mxu0 0.0
  %330 = vmatpush1.msra.mxu0 0.0
  %331 = vmatprep.subr.mxu0 0.0
  %332 = vmatpush1.msra.mxu0 0.0
  %333 = vmatprep.subr.mxu0 0.0
  %334 = vmatpush1.msra.mxu0 0.0
  %335 = vmatprep.subr.mxu0 0.0
  %336 = vmatpush1.msra.mxu0 0.0
  %337 = vmatprep.subr.mxu0 0.0
  %338 = vmatpush1.msra.mxu0 0.0
  %339 = vmatprep.subr.mxu0 0.0
  %340 = vmatpush1.msra.mxu0 0.0
  %341 = vmatprep.subr.mxu0 0.0
  %342 = vmatpush1.msra.mxu0 0.0
  %343 = vmatprep.subr.mxu0 0.0
  %344 = vmatpush1.msra.mxu0 0.0
  %345 = vmatprep.subr.mxu0 0.0
  %346 = vmatpush1.msra.mxu0 0.0
  %347 = vmatprep.subr.mxu0 0.0
  %348 = vmatpush1.msra.mxu0 0.0
  %349 = vmatprep.subr.mxu0 0.0
  %350 = vmatpush1.msra.mxu0 0.0
  %351 = vmatprep.subr.mxu0 0.0
  %352 = vmatpush1.msra.mxu0 %v310
  %353 = vmatprep.subr.mxu0 0.0
  %354 = vmatpush2.msra.mxu0 0.0
  %355 = vmatprep.subr.mxu0 0.0
  %356 = vmatpush2.msra.mxu0 0.0
  %357 = vmatprep.subr.mxu0 0.0
  %358 = vmatpush2.msra.mxu0 0.0
  %359 = vmatprep.subr.mxu0 0.0
  %360 = vmatpush2.msra.mxu0 0.0
  %361 = vmatprep.subr.mxu0 0.0
  %362 = vmatpush2.msra.mxu0 0.0
  %363 = vmatprep.subr.mxu0 0.0
  %364 = vmatpush2.msra.mxu0 0.0
  %365 = vmatprep.subr.mxu0 0.0
  %366 = vmatpush2.msra.mxu0 0.0
  %367 = vmatprep.subr.mxu0 0.0
  %368 = vmatpush2.msra.mxu0 0.0
  %369 = vmatprep.subr.mxu0 0.0
  %370 = vmatpush2.msra.mxu0 0.0
  %371 = vmatprep.subr.mxu0 0.0
  %372 = vmatpush2.msra.mxu0 0.0
  %373 = vmatprep.subr.mxu0 0.0
  %374 = vmatpush2.msra.mxu0 0.0
  %375 = vmatprep.subr.mxu0 0.0
  %376 = vmatpush2.msra.mxu0 0.0
  %377 = vmatprep.subr.mxu0 0.0
  %378 = vmatpush2.msra.mxu0 0.0
  %379 = vmatprep.subr.mxu0 0.0
  %380 = vmatpush2.msra.mxu0 0.0
  %381 = vmatprep.subr.mxu0 0.0
  %382 = vmatpush2.msra.mxu0 0.0
  %383 = vmatprep.subr.mxu0 0.0
  %384 = vmatpush2.msra.mxu0 0.0
  %385 = vmatprep.mubr.f32.mxu0 0.0
  %386 = vmatmul.mubr.f32.gmra.mxu0 %v319
  %v387 = vpop.f32.mrf.mxu0
  %v388 = vadd.f32 %v315, %v387
  %v389 = vpop.f32.mrf.mxu0
  %390 = vdwg.mxu0
  %v391 = vrsqrt.pop %v388
  %v392 = vmul.f32 %v306, %v391
  %v393 = vld [vmem:[%s12] sm:$0xff]
  %v394 = vld [vmem:[%s12 + $0x8] sm:$0xff]
  %v395 = vld [vmem:[%s12 + $0x10] sm:$0xff]
  %v396 = vld [vmem:[%s12 + $0x18] sm:$0xff]
  %v397 = vld [vmem:[%s12 + $0x20] sm:$0xff]
  %v398 = vld [vmem:[%s12 + $0x28] sm:$0xff]
  %v399 = vld [vmem:[%s12 + $0x30] sm:$0xff]
  %v400 = vld [vmem:[%s12 + $0x38] sm:$0xff]
  %v401 = vld [vmem:[%s12 + $0x40] sm:$0xff]
  %v402 = vld [vmem:[%s12 + $0x48] sm:$0xff]
  %v403 = vld [vmem:[%s12 + $0x50] sm:$0xff]
  %v404 = vld [vmem:[%s12 + $0x58] sm:$0xff]
  %v405 = vld [vmem:[%s12 + $0x60] sm:$0xff]
  %v406 = vld [vmem:[%s12 + $0x68] sm:$0xff]
  %v407 = vld [vmem:[%s12 + $0x70] sm:$0xff]
  %v408 = vld [vmem:[%s12 + $0x78] sm:$0xff]
  %409 = vmatprep.subr.mxu0 0.0
  %410 = vmatpush1.msra.mxu0 %v408
  %411 = vmatprep.subr.mxu0 0.0
  %412 = vmatpush1.msra.mxu0 %v407
  %413 = vmatprep.subr.mxu0 0.0
  %414 = vmatpush1.msra.mxu0 %v406
  %415 = vmatprep.subr.mxu0 0.0
  %416 = vmatpush1.msra.mxu0 %v405
  %417 = vmatprep.subr.mxu0 0.0
  %418 = vmatpush1.msra.mxu0 %v404
  %419 = vmatprep.subr.mxu0 0.0
  %420 = vmatpush1.msra.mxu0 %v403
  %421 = vmatprep.subr.mxu0 0.0
  %422 = vmatpush1.msra.mxu0 %v402
  %423 = vmatprep.subr.mxu0 0.0
  %424 = vmatpush1.msra.mxu0 %v401
  %425 = vmatprep.subr.mxu0 0.0
  %426 = vmatpush1.msra.mxu0 %v400
  %427 = vmatprep.subr.mxu0 0.0
  %428 = vmatpush1.msra.mxu0 %v399
  %429 = vmatprep.subr.mxu0 0.0
  %430 = vmatpush1.msra.mxu0 %v398
  %431 = vmatprep.subr.mxu0 0.0
  %432 = vmatpush1.msra.mxu0 %v397
  %433 = vmatprep.subr.mxu0 0.0
  %434 = vmatpush1.msra.mxu0 %v396
  %435 = vmatprep.subr.mxu0 0.0
  %436 = vmatpush1.msra.mxu0 %v395
  %437 = vmatprep.subr.mxu0 0.0
  %438 = vmatpush1.msra.mxu0 %v394
  %439 = vmatprep.subr.mxu0 0.0
  %440 = vmatpush1.msra.mxu0 %v393
  %441 = vmatprep.subr.mxu0 0.0
  %442 = vmatpush2.msra.mxu0 0.0
  %443 = vmatprep.subr.mxu0 0.0
  %444 = vmatpush2.msra.mxu0 0.0
  %445 = vmatprep.subr.mxu0 0.0
  %446 = vmatpush2.msra.mxu0 0.0
  %447 = vmatprep.subr.mxu0 0.0
  %448 = vmatpush2.msra.mxu0 0.0
  %449 = vmatprep.subr.mxu0 0.0
  %450 = vmatpush2.msra.mxu0 0.0
  %451 = vmatprep.subr.mxu0 0.0
  %452 = vmatpush2.msra.mxu0 0.0
  %453 = vmatprep.subr.mxu0 0.0
  %454 = vmatpush2.msra.mxu0 0.0
  %455 = vmatprep.subr.mxu0 0.0
  %456 = vmatpush2.msra.mxu0 0.0
  %457 = vmatprep.subr.mxu0 0.0
  %458 = vmatpush2.msra.mxu0 0.0
  %459 = vmatprep.subr.mxu0 0.0
  %460 = vmatpush2.msra.mxu0 0.0
  %461 = vmatprep.subr.mxu0 0.0
  %462 = vmatpush2.msra.mxu0 0.0
  %463 = vmatprep.subr.mxu0 0.0
  %464 = vmatpush2.msra.mxu0 0.0
  %465 = vmatprep.subr.mxu0 0.0
  %466 = vmatpush2.msra.mxu0 0.0
  %467 = vmatprep.subr.mxu0 0.0
  %468 = vmatpush2.msra.mxu0 0.0
  %469 = vmatprep.subr.mxu0 0.0
  %470 = vmatpush2.msra.mxu0 0.0
  %471 = vmatprep.subr.mxu0 0.0
  %472 = vmatpush2.msra.mxu0 0.0
  %473 = vmatprep.mubr.f32.mxu0 0.0
  %474 = vmatmul.mubr.f32.gmra.mxu0 %v392
  %v475 = vpop.f32.mrf.mxu0
  %v476 = vadd.f32 0.0, %v475
  %v477 = vpop.f32.mrf.mxu0
  %478 = vdwg.mxu0
  %v479 = vld [vmem:[%s8] sm:$0xff]
  %v481 = vsel %vm317, %v479, 0
  %483 = vmatprep.subr.mxu0 0.0
  %484 = vmatpush1.msra.mxu0 0.0
  %485 = vmatprep.subr.mxu0 0.0
  %486 = vmatpush1.msra.mxu0 0.0
  %487 = vmatprep.subr.mxu0 0.0
  %488 = vmatpush1.msra.mxu0 0.0
  %489 = vmatprep.subr.mxu0 0.0
  %490 = vmatpush1.msra.mxu0 0.0
  %491 = vmatprep.subr.mxu0 0.0
  %492 = vmatpush1.msra.mxu0 0.0
  %493 = vmatprep.subr.mxu0 0.0
  %494 = vmatpush1.msra.mxu0 0.0
  %495 = vmatprep.subr.mxu0 0.0
  %496 = vmatpush1.msra.mxu0 0.0
  %497 = vmatprep.subr.mxu0 0.0
  %498 = vmatpush1.msra.mxu0 0.0
  %499 = vmatprep.subr.mxu0 0.0
  %500 = vmatpush1.msra.mxu0 0.0
  %501 = vmatprep.subr.mxu0 0.0
  %502 = vmatpush1.msra.mxu0 0.0
  %503 = vmatprep.subr.mxu0 0.0
  %504 = vmatpush1.msra.mxu0 0.0
  %505 = vmatprep.subr.mxu0 0.0
  %506 = vmatpush1.msra.mxu0 0.0
  %507 = vmatprep.subr.mxu0 0.0
  %508 = vmatpush1.msra.mxu0 0.0
  %509 = vmatprep.subr.mxu0 0.0
  %510 = vmatpush1.msra.mxu0 0.0
  %511 = vmatprep.subr.mxu0 0.0
  %512 = vmatpush1.msra.mxu0 0.0
  %513 = vmatprep.subr.mxu0 0.0
  %514 = vmatpush1.msra.mxu0 %v476
  %515 = vmatprep.subr.mxu0 0.0
  %516 = vmatpush2.msra.mxu0 0.0
  %517 = vmatprep.subr.mxu0 0.0
  %518 = vmatpush2.msra.mxu0 0.0
  %519 = vmatprep.subr.mxu0 0.0
  %520 = vmatpush2.msra.mxu0 0.0
  %521 = vmatprep.subr.mxu0 0.0
  %522 = vmatpush2.msra.mxu0 0.0
  %523 = vmatprep.subr.mxu0 0.0
  %524 = vmatpush2.msra.mxu0 0.0
  %525 = vmatprep.subr.mxu0 0.0
  %526 = vmatpush2.msra.mxu0 0.0
  %527 = vmatprep.subr.mxu0 0.0
  %528 = vmatpush2.msra.mxu0 0.0
  %529 = vmatprep.subr.mxu0 0.0
  %530 = vmatpush2.msra.mxu0 0.0
  %531 = vmatprep.subr.mxu0 0.0
  %532 = vmatpush2.msra.mxu0 0.0
  %533 = vmatprep.subr.mxu0 0.0
  %534 = vmatpush2.msra.mxu0 0.0
  %535 = vmatprep.subr.mxu0 0.0
  %536 = vmatpush2.msra.mxu0 0.0
  %537 = vmatprep.subr.mxu0 0.0
  %538 = vmatpush2.msra.mxu0 0.0
  %539 = vmatprep.subr.mxu0 0.0
  %540 = vmatpush2.msra.mxu0 0.0
  %541 = vmatprep.subr.mxu0 0.0
  %542 = vmatpush2.msra.mxu0 0.0
  %543 = vmatprep.subr.mxu0 0.0
  %544 = vmatpush2.msra.mxu0 0.0
  %545 = vmatprep.subr.mxu0 0.0
  %546 = vmatpush2.msra.mxu0 0.0
  %547 = vmatprep.mubr.f32.mxu0 0.0
  %548 = vmatmul.mubr.f32.gmra.mxu0 %v481
  %v549 = vpop.f32.mrf.mxu0
  %v550 = vadd.f32 0.0, %v549
  %v551 = vpop.f32.mrf.mxu0
  %552 = vdwg.mxu0
  %v553 = vxor.u32 %v550, 2147483648
  %v554 = vmul.f32 %v553, 1.442695
  %v555 = vpow.pop %v554
  %v556 = vadd.f32 %v555, 1.0
  %v557 = vrcp.pop %v556
  %v558 = vmul.f32 1.0, %v557
  %v559 = vld [vmem:[%s13] sm:$0x3]
  %vm560 = vcmask 15360
  %v562 = vsel %vm560, %v558, 0
  %vm564 = vcmask 1041408
  %v566 = vsel %vm564, %v559, 0
  %568 = vmatprep.subr.mxu0 0.0
  %569 = vmatpush1.msra.mxu0 0.0
  %570 = vmatprep.subr.mxu0 0.0
  %571 = vmatpush1.msra.mxu0 0.0
  %572 = vmatprep.subr.mxu0 0.0
  %573 = vmatpush1.msra.mxu0 0.0
  %574 = vmatprep.subr.mxu0 0.0
  %575 = vmatpush1.msra.mxu0 0.0
  %576 = vmatprep.subr.mxu0 0.0
  %577 = vmatpush1.msra.mxu0 0.0
  %578 = vmatprep.subr.mxu0 0.0
  %579 = vmatpush1.msra.mxu0 0.0
  %580 = vmatprep.subr.mxu0 0.0
  %581 = vmatpush1.msra.mxu0 0.0
  %582 = vmatprep.subr.mxu0 0.0
  %583 = vmatpush1.msra.mxu0 0.0
  %584 = vmatprep.subr.mxu0 0.0
  %585 = vmatpush1.msra.mxu0 0.0
  %586 = vmatprep.subr.mxu0 0.0
  %587 = vmatpush1.msra.mxu0 0.0
  %588 = vmatprep.subr.mxu0 0.0
  %589 = vmatpush1.msra.mxu0 0.0
  %590 = vmatprep.subr.mxu0 0.0
  %591 = vmatpush1.msra.mxu0 0.0
  %592 = vmatprep.subr.mxu0 0.0
  %593 = vmatpush1.msra.mxu0 0.0
  %594 = vmatprep.subr.mxu0 0.0
  %595 = vmatpush1.msra.mxu0 0.0
  %596 = vmatprep.subr.mxu0 0.0
  %597 = vmatpush1.msra.mxu0 0.0
  %598 = vmatprep.subr.mxu0 0.0
  %599 = vmatpush1.msra.mxu0 %v566
  %600 = vmatprep.subr.mxu0 0.0
  %601 = vmatpush2.msra.mxu0 0.0
  %602 = vmatprep.subr.mxu0 0.0
  %603 = vmatpush2.msra.mxu0 0.0
  %604 = vmatprep.subr.mxu0 0.0
  %605 = vmatpush2.msra.mxu0 0.0
  %606 = vmatprep.subr.mxu0 0.0
  %607 = vmatpush2.msra.mxu0 0.0
  %608 = vmatprep.subr.mxu0 0.0
  %609 = vmatpush2.msra.mxu0 0.0
  %610 = vmatprep.subr.mxu0 0.0
  %611 = vmatpush2.msra.mxu0 0.0
  %612 = vmatprep.subr.mxu0 0.0
  %613 = vmatpush2.msra.mxu0 0.0
  %614 = vmatprep.subr.mxu0 0.0
  %615 = vmatpush2.msra.mxu0 0.0
  %616 = vmatprep.subr.mxu0 0.0
  %617 = vmatpush2.msra.mxu0 0.0
  %618 = vmatprep.subr.mxu0 0.0
  %619 = vmatpush2.msra.mxu0 0.0
  %620 = vmatprep.subr.mxu0 0.0
  %621 = vmatpush2.msra.mxu0 0.0
  %622 = vmatprep.subr.mxu0 0.0
  %623 = vmatpush2.msra.mxu0 0.0
  %624 = vmatprep.subr.mxu0 0.0
  %625 = vmatpush2.msra.mxu0 0.0
  %626 = vmatprep.subr.mxu0 0.0
  %627 = vmatpush2.msra.mxu0 0.0
  %628 = vmatprep.subr.mxu0 0.0
  %629 = vmatpush2.msra.mxu0 0.0
  %630 = vmatprep.subr.mxu0 0.0
  %631 = vmatpush2.msra.mxu0 0.0
  %632 = vmatprep.mubr.f32.mxu0 0.0
  %633 = vmatmul.mubr.f32.gmra.mxu0 %v562
  %v634 = vpop.f32.mrf.mxu0
  %v635 = vadd.f32 0.0, %v634
  %v636 = vpop.f32.mrf.mxu0
  %637 = vdwg.mxu0
  %v638 = vmul.f32 %v392, %v635
  %v639 = vld [vmem:[%s9] sm:$0xff]
  %v640 = vld [vmem:[%s1] sm:$0xf]
  %v641 = vld [vmem:[%s10] sm:$0xff]
  %643 = vset.pattern.permute.xlu0 0
  %644 = vperm.xlu0 %643, %v641
  %v645 = vpop.permute.xlu0 %644
  %vm647 = vcmask 31744
  %v649 = vsel %vm647, %v639, 0
  %v652 = vsel %vm63, %v640, 0
  %654 = vmatprep.subr.mxu0 0.0
  %655 = vmatpush1.msra.mxu0 0.0
  %656 = vmatprep.subr.mxu0 0.0
  %657 = vmatpush1.msra.mxu0 0.0
  %658 = vmatprep.subr.mxu0 0.0
  %659 = vmatpush1.msra.mxu0 0.0
  %660 = vmatprep.subr.mxu0 0.0
  %661 = vmatpush1.msra.mxu0 0.0
  %662 = vmatprep.subr.mxu0 0.0
  %663 = vmatpush1.msra.mxu0 0.0
  %664 = vmatprep.subr.mxu0 0.0
  %665 = vmatpush1.msra.mxu0 0.0
  %666 = vmatprep.subr.mxu0 0.0
  %667 = vmatpush1.msra.mxu0 0.0
  %668 = vmatprep.subr.mxu0 0.0
  %669 = vmatpush1.msra.mxu0 0.0
  %670 = vmatprep.subr.mxu0 0.0
  %671 = vmatpush1.msra.mxu0 0.0
  %672 = vmatprep.subr.mxu0 0.0
  %673 = vmatpush1.msra.mxu0 0.0
  %674 = vmatprep.subr.mxu0 0.0
  %675 = vmatpush1.msra.mxu0 0.0
  %676 = vmatprep.subr.mxu0 0.0
  %677 = vmatpush1.msra.mxu0 0.0
  %678 = vmatprep.subr.mxu0 0.0
  %679 = vmatpush1.msra.mxu0 0.0
  %680 = vmatprep.subr.mxu0 0.0
  %681 = vmatpush1.msra.mxu0 0.0
  %682 = vmatprep.subr.mxu0 0.0
  %683 = vmatpush1.msra.mxu0 0.0
  %684 = vmatprep.subr.mxu0 0.0
  %685 = vmatpush1.msra.mxu0 %v652
  %686 = vmatprep.subr.mxu0 0.0
  %687 = vmatpush2.msra.mxu0 0.0
  %688 = vmatprep.subr.mxu0 0.0
  %689 = vmatpush2.msra.mxu0 0.0
  %690 = vmatprep.subr.mxu0 0.0
  %691 = vmatpush2.msra.mxu0 0.0
  %692 = vmatprep.subr.mxu0 0.0
  %693 = vmatpush2.msra.mxu0 0.0
  %694 = vmatprep.subr.mxu0 0.0
  %695 = vmatpush2.msra.mxu0 0.0
  %696 = vmatprep.subr.mxu0 0.0
  %697 = vmatpush2.msra.mxu0 0.0
  %698 = vmatprep.subr.mxu0 0.0
  %699 = vmatpush2.msra.mxu0 0.0
  %700 = vmatprep.subr.mxu0 0.0
  %701 = vmatpush2.msra.mxu0 0.0
  %702 = vmatprep.subr.mxu0 0.0
  %703 = vmatpush2.msra.mxu0 0.0
  %704 = vmatprep.subr.mxu0 0.0
  %705 = vmatpush2.msra.mxu0 0.0
  %706 = vmatprep.subr.mxu0 0.0
  %707 = vmatpush2.msra.mxu0 0.0
  %708 = vmatprep.subr.mxu0 0.0
  %709 = vmatpush2.msra.mxu0 0.0
  %710 = vmatprep.subr.mxu0 0.0
  %711 = vmatpush2.msra.mxu0 0.0
  %712 = vmatprep.subr.mxu0 0.0
  %713 = vmatpush2.msra.mxu0 0.0
  %714 = vmatprep.subr.mxu0 0.0
  %715 = vmatpush2.msra.mxu0 0.0
  %716 = vmatprep.subr.mxu0 0.0
  %717 = vmatpush2.msra.mxu0 0.0
  %718 = vmatprep.mubr.f32.mxu0 0.0
  %719 = vmatmul.mubr.f32.gmra.mxu0 %v649
  %v720 = vpop.f32.mrf.mxu0
  %v721 = vadd.f32 %v645, %v720
  %v722 = vpop.f32.mrf.mxu0
  %723 = vdwg.mxu0
  %v724 = vadd.f32 %v638, %v721
  %725 = vst [vmem:[%s14] sm:$0xff] %v724
  // Predicated region
  $region58: #{res_block_down_forward.1} parent=0 // pred_check
    _
  $region59: #{res_block_down_forward.1} parent=0 // pred_check_branch
    %727 = sbr.rel (0) target = $region61
  $region60: #{res_block_down_forward.1} parent=0 // pred_region
    _
  $region61: #{res_block_down_forward.1} parent=0 // pred_fallthru
    _
  // Predicated region
  $region62: #{res_block_down_forward.1} parent=0 // pred_check
    _
  $region63: #{res_block_down_forward.1} parent=0 // pred_check_branch
    %729 = sbr.rel (0) target = $region65
  $region64: #{res_block_down_forward.1} parent=0 // pred_region
    _
  $region65: #{res_block_down_forward.1} parent=0 // pred_fallthru
    _

</llo_original>
